<compile_context>
chip_gen: v6e
topology: v6e:2x2x1
jax: 0.10.0
libtpu: 0.0.40
codegen_flags: <defaults>
</compile_context>

<pallas_src>
import functools
import math

import jax
import jax.numpy as jnp
from jax.experimental import pallas as pl
from jax.experimental.pallas import tpu as pltpu


# ---------------------------------------------------------------------------
# Kernel
# ---------------------------------------------------------------------------
def _offset_scale_kernel(x_ref, gb_ref, o_ref):
    # x_ref: (bm, bn); gb_ref: (2, bn) with row 0 = gamma, row 1 = beta.
    x = x_ref[...]
    g = gb_ref[0:1, :]  # (1, bn) -> broadcasts over rows
    b = gb_ref[1:2, :]
    o_ref[...] = (x * g + b).astype(o_ref.dtype)


# ---------------------------------------------------------------------------
# Wrapper
# ---------------------------------------------------------------------------
_MAX_PACK_LANES = 1024                 # cap on packed row width when folding rows
_TILE_BYTES = 8 << 20                  # ~8 MiB per x tile (HBM roofline plateau)
_MIN_ROW_BLOCKS = 8                    # keep >= this many row blocks on larger inputs
_DEFAULT_MIN_PALLAS_BYTES = 2 << 20    # below this, fused XLA beats pallas overhead


def _lane_pack_factor(m_rows, dim):
    """Return (k, pad_rows): fold k rows so k*dim % 128 == 0, padding rows if needed."""
    if dim % 128 == 0:
        return 1, 0
    base = 128 // math.gcd(dim, 128)   # smallest k making k*dim a multiple of 128
    if base * dim > _MAX_PACK_LANES:
        return 1, 0                    # dim too wide to fold; only the tail vreg is masked
    k = base
    # Grow k (powers of two) only while it costs no extra padding and fits the lane cap.
    while m_rows % (2 * k) == 0 and 2 * k * dim <= _MAX_PACK_LANES:
        k *= 2
    pad_rows = (-m_rows) % k
    return k, pad_rows


@functools.partial(jax.jit, static_argnames=("min_pallas_bytes",))
def offset_scale(x, gamma, beta, *, min_pallas_bytes=_DEFAULT_MIN_PALLAS_BYTES):
    """out = x * gamma + beta; gamma/beta shape (dim,), broadcast over leading dims.

    Output dtype follows x.dtype (params are cast to the activation dtype).
    """
    orig_shape = x.shape
    dim = orig_shape[-1]
    assert gamma.shape == (dim,) and beta.shape == (dim,)

    out_dtype = x.dtype
    gamma = gamma.astype(out_dtype)
    beta = beta.astype(out_dtype)

    itemsize = jnp.dtype(out_dtype).itemsize
    total_bytes = x.size * itemsize

    # Small-input fallback: pallas_call fixed overhead dominates tiny tensors,
    # while XLA fuses the elementwise op for free.
    if total_bytes < min_pallas_bytes:
        return x * gamma + beta

    # Sublane packing of the row tile: f32 -> 8, bf16 -> 16, int8/fp8 -> 32.
    sub = {4: 8, 2: 16, 1: 32}.get(itemsize, 8)

    # ---- lane-dense repacking ------------------------------------------------
    x2d = x.reshape(-1, dim)
    m_rows = x2d.shape[0]
    k, pad_rows = _lane_pack_factor(m_rows, dim)
    if pad_rows:
        # A handful (< k <= 128) of zero rows keeps every store unmasked/lane-dense,
        # which is the documented ~4x store-side lever for sub-128 last dims.
        x2d = jnp.pad(x2d, ((0, pad_rows), (0, 0)))
    if k > 1:
        x2d = x2d.reshape(-1, k * dim)
        gamma_l = jnp.tile(gamma, k)
        beta_l = jnp.tile(beta, k)
    else:
        gamma_l, beta_l = gamma, beta

    m2, n = x2d.shape
    gb = jnp.stack([gamma_l, beta_l])  # (2, n), already out_dtype

    # ---- tile sizing -----------------------------------------------------------
    if n % 128 == 0:
        max_bn = max(128, (_TILE_BYTES // (sub * itemsize)) // 128 * 128)
        bn = min(n, max_bn)
    else:
        bn = n  # ragged wide last dim: take it whole (only the tail vreg is masked)

    bm = min(m2, max(sub, _TILE_BYTES // max(1, bn * itemsize)))
    # Keep at least _MIN_ROW_BLOCKS row blocks on larger inputs: megacore balance
    # on v7x's two TensorCores and proper load/compute/store overlap everywhere.
    if total_bytes >= (4 << 20) and m2 > sub:
        bm = min(bm, pl.cdiv(m2, _MIN_ROW_BLOCKS))
    if bm < m2:
        bm = max(sub, (bm // sub) * sub)

    m_blocks = pl.cdiv(m2, bm)
    n_blocks = pl.cdiv(n, bn)

    if n_blocks == 1:
        grid = (m_blocks,)
        x_spec = pl.BlockSpec((bm, bn), lambda i: (i, 0))
        gb_spec = pl.BlockSpec((2, bn), lambda i: (0, 0))   # stays resident all grid long
        o_spec = pl.BlockSpec((bm, bn), lambda i: (i, 0))
        dim_sem = ("parallel",)
    else:
        # Lane axis OUTER so the (2, bn) gamma/beta tile is only re-fetched when j
        # changes, not on every inner row step.
        grid = (n_blocks, m_blocks)
        x_spec = pl.BlockSpec((bm, bn), lambda j, i: (i, j))
        gb_spec = pl.BlockSpec((2, bn), lambda j, i: (0, j))
        o_spec = pl.BlockSpec((bm, bn), lambda j, i: (i, j))
        dim_sem = ("parallel", "parallel")

    # VMEM: double-buffered in/out tiles + gb + headroom, capped at 48 MiB so the
    # v7x (64 MiB physical per TC) keeps room for Mosaic internal scratch.
    tile_bytes = bm * bn * itemsize
    vmem_needed = 2 * (2 * tile_bytes + 2 * bn * itemsize) + (4 << 20)
    vmem_limit = int(min(48 << 20, vmem_needed))

    out = pl.pallas_call(
        _offset_scale_kernel,
        out_shape=jax.ShapeDtypeStruct((m2, n), out_dtype),
        grid_spec=pltpu.PrefetchScalarGridSpec(
            num_scalar_prefetch=0,
            grid=grid,
            in_specs=[x_spec, gb_spec],
            out_specs=o_spec,
        ),
        compiler_params=pltpu.CompilerParams(
            dimension_semantics=dim_sem,
            vmem_limit_bytes=vmem_limit,
        ),
    )(x2d, gb)

    if k > 1:
        out = out.reshape(-1, dim)
    if pad_rows:
        out = out[:m_rows]
    return out.reshape(orig_shape)


if __name__ == "__main__":
    key = jax.random.PRNGKey(0)
    k_x, k_g, k_x2 = jax.random.split(key, 3)

    batch, seq, dim = 2, 8, 32

    # Parameter init matching the module: gamma ~ Normal(0, 0.02), beta = zeros.
    gamma = 0.02 * jax.random.normal(k_g, (dim,), dtype=jnp.float32)
    beta = jnp.zeros((dim,), dtype=jnp.float32)

    # 1) Small canonical shape, forced through the Pallas path (lane-packed rows).
    x = jax.random.normal(k_x, (batch, seq, dim), dtype=jnp.float32)
    out = jax.block_until_ready(offset_scale(x, gamma, beta, min_pallas_bytes=0))
    ref = x * gamma + beta
    assert out.shape == x.shape and out.dtype == x.dtype
    assert jnp.allclose(out, ref, atol=1e-6, rtol=1e-6)

    # 2) Ragged row count (rows % pack-factor != 0) -> exercises the pad-and-slice path.
    x2 = jax.random.normal(k_x2, (3, 5, dim), dtype=jnp.float32)
    out2 = jax.block_until_ready(offset_scale(x2, gamma, beta, min_pallas_bytes=0))
    ref2 = x2 * gamma + beta
    assert out2.shape == x2.shape
    assert jnp.allclose(out2, ref2, atol=1e-6, rtol=1e-6)

    # 3) Default call on a tiny input takes the fused-XLA fallback path.
    out3 = jax.block_until_ready(offset_scale(x, gamma, beta))
    assert jnp.allclose(out3, ref, atol=1e-6, rtol=1e-6)

    print("KERNEL_OK")
</pallas_src>

<mosaic_0001>
module attributes {stable_mosaic.version = 11 : i64} {
  func.func @_offset_scale_kernel(%arg0: i32, %arg1: memref<1x512xf32, #tpu.memory_space<vmem>>, %arg2: memref<2x512xf32, #tpu.memory_space<vmem>>, %arg3: memref<1x512xf32, #tpu.memory_space<vmem>>) attributes {dimension_semantics = [#tpu.dimension_semantics<parallel>], iteration_bounds = array<i64: 1>, scalar_prefetch = 0 : i64, scratch_operands = 0 : i64, tpu.core_type = #tpu.core_type<tc>, window_params = [{transform_indices = @transform_0, window_bounds = array<i64: 1, 512>}, {pipeline_mode = #tpu.pipeline_mode<synchronous>, transform_indices = @transform_1, window_bounds = array<i64: 2, 512>}, {transform_indices = @transform_2, window_bounds = array<i64: 1, 512>}]} {
    %c0 = arith.constant 0 : index
    %c0_0 = arith.constant 0 : index
    %0 = vector.load %arg1[%c0, %c0_0] : memref<1x512xf32, #tpu.memory_space<vmem>>, vector<1x512xf32>
    %c0_1 = arith.constant 0 : index
    %c0_2 = arith.constant 0 : index
    %1 = vector.load %arg2[%c0_1, %c0_2] : memref<2x512xf32, #tpu.memory_space<vmem>>, vector<1x512xf32>
    %c1 = arith.constant 1 : index
    %c0_3 = arith.constant 0 : index
    %2 = vector.load %arg2[%c1, %c0_3] : memref<2x512xf32, #tpu.memory_space<vmem>>, vector<1x512xf32>
    %3 = arith.mulf %0, %1 : vector<1x512xf32>
    %4 = arith.addf %3, %2 : vector<1x512xf32>
    %c0_4 = arith.constant 0 : index
    %c0_5 = arith.constant 0 : index
    %5 = vector.load %arg3[%c0_4, %c0_5] : memref<1x512xf32, #tpu.memory_space<vmem>>, vector<1x512xf32>
    tpu.vector_store %arg3[%c0_4, %c0_5], %4 {strides = array<i32>} : memref<1x512xf32, #tpu.memory_space<vmem>>, vector<1x512xf32>,
    return
  }
  func.func @transform_0(%arg0: i32) -> (i32, i32) {
    %c0_i32 = arith.constant 0 : i32
    %c0_i32_0 = arith.constant 0 : i32
    return %arg0, %c0_i32 : i32, i32
  }
  func.func @transform_1(%arg0: i32) -> (i32, i32) {
    %c0_i32 = arith.constant 0 : i32
    %c0_i32_0 = arith.constant 0 : i32
    %c0_i32_1 = arith.constant 0 : i32
    return %c0_i32, %c0_i32_0 : i32, i32
  }
  func.func @transform_2(%arg0: i32) -> (i32, i32) {
    %c0_i32 = arith.constant 0 : i32
    %c0_i32_0 = arith.constant 0 : i32
    return %arg0, %c0_i32 : i32, i32
  }
}

</mosaic_0001>

<llo_original>
// kernel: tile.18
$region0: #{tile.18}
  %s0 = inlined_call_operand.vmem [shape: f32[16,32], index: 0, kind: input, shape index: {}]
  %s1 = inlined_call_operand.vmem [shape: f32[1,512], index: 1, kind: output, shape index: {}]
  $region1: #{tile.18} parent=0
    #allocation0 [shape = 'u8[16384]{0}', space=vmem, size = 0x4000, scoped, tag = 'scoped mem for output reshape']
    %v2 = vld [vmem:[%s0] ss:$4 sm:$0xf]
    %vm3 = vcmask 261120
    %4 = vst.msk [vmem:[#allocation0] ss:$8 sm:$0xf] %vm3, %v2
    %s5 = scalar_lea.vmem %s0, 3
    %v6 = vld [vmem:[%s5] ss:$4 sm:$0xf]
    %7 = vrot.lane.b32.xlu0 %v6, 96
    %v8 = vpop.permute.xlu0 %7
    %vm9 = vcmask 1048320
    %10 = vst.msk [vmem:[#allocation0] ss:$8 sm:$0xf] %vm9, %v8
    %s11 = scalar_lea.vmem %s0, 2
    %v12 = vld [vmem:[%s11] ss:$4 sm:$0xf]
    %13 = vrot.lane.b32.xlu0 %v12, 64
    %v14 = vpop.permute.xlu0 %13
    %vm15 = vcmask 785920
    %16 = vst.msk [vmem:[#allocation0] ss:$8 sm:$0xf] %vm15, %v14
    %s17 = scalar_lea.vmem %s0, 1
    %v18 = vld [vmem:[%s17] ss:$4 sm:$0xf]
    %19 = vrot.lane.b32.xlu0 %v18, 32
    %v20 = vpop.permute.xlu0 %19
    %vm21 = vcmask 523520
    %22 = vst.msk [vmem:[#allocation0] ss:$8 sm:$0xf] %vm21, %v20
    %s24 = sshll.u32 1, 1
    %s25 = ssub.s32 %s24, 1
    %v27 = vld [vmem:[#allocation0] sm:%s25]
    %s28 = sshll.u32 1, 1
    %s29 = ssub.s32 %s28, 1
    %30 = vst [vmem:[%s1] sm:%s29] %v27
    %s31 = scalar_lea.vmem [#allocation0], 8
    %v32 = vld [vmem:[%s31] sm:%s25]
    %s33 = sshll.u32 1, 1
    %s34 = ssub.s32 %s33, 1
    %s35 = scalar_lea.vmem %s1, 1
    %36 = vst [vmem:[%s35] sm:%s34] %v32
    %s37 = scalar_lea.vmem [#allocation0], 16
    %v38 = vld [vmem:[%s37] sm:%s25]
    %s39 = sshll.u32 1, 1
    %s40 = ssub.s32 %s39, 1
    %s41 = smul.addr 1, 2
    %s42 = scalar_lea.vmem %s1, %s41
    %43 = vst [vmem:[%s42] sm:%s40] %v38
    %s44 = scalar_lea.vmem [#allocation0], 24
    %v45 = vld [vmem:[%s44] sm:%s25]
    %s46 = sshll.u32 1, 1
    %s47 = ssub.s32 %s46, 1
    %s48 = smul.addr 1, 3
    %s49 = scalar_lea.vmem %s1, %s48
    %50 = vst [vmem:[%s49] sm:%s47] %v45

// kernel: tile.13
$region0: #{tile.13}
  #allocation0 [shape = 's32[1]{0}', space=sflag, size = 0x4, scoped, tag = 'scoped memory for tile.13']
  %s0 = inlined_call_operand.vmem [shape: f32[32], index: 0, kind: input, shape index: {}]
  %s1 = inlined_call_operand.vmem [shape: f32[16,32], index: 1, kind: output, shape index: {}]
  // Predicated region
  $region2: #{tile.13} parent=0 // pred_check
    _
  $region3: #{tile.13} parent=0 // pred_check_branch
    %3 = sbr.rel (0) target = $region5
  $region4: #{tile.13} parent=0 // pred_region
    _
  $region5: #{tile.13} parent=0 // pred_fallthru
    _
  %v4 = vld [vmem:[%s0] ss:$0 sm:$0xff]
  %5 = vst [vmem:[%s1] sm:$0xff] %v4
  %s6 = scalar_lea.vmem %s1, 8
  %7 = vst [vmem:[%s6] sm:$0xff] %v4

// kernel: offset_scale.1
$region0: #{offset_scale.1}
  #allocation0 [shape = 'u32[]', space=smem, size = 0x4, offset = 0x4, fixed_abs, tag = 'smem constant byte address 0x4 - core index']
  #allocation1 [shape = 'u32[144,128]{1,0:T(1,128)}', space=vmem, size = 0x12000, scoped, tag = 'internal scratch']
  %s0 = inlined_call_operand.vmem [shape: f32[1,512], index: 0, kind: input, shape index: {}]
  %s1 = inlined_call_operand.vmem [shape: f32[2,512], index: 1, kind: input, shape index: {}]
  %s2 = inlined_call_operand.vmem [shape: f32[1,512], index: 2, kind: output, shape index: {}]
  %s3 = sld [smem:[#allocation0]]
  $region18: #{offset_scale.1} parent=0
    _
  %s5 = ssub.s32 1, %s3
  %s6 = scalar_select 0, %s5, %s3
  // Predicated region
  $region2: #{offset_scale.1} parent=0 // pred_check
    _
  $region3: #{offset_scale.1} parent=0 // pred_check_branch
    %8 = sbr.rel (0) target = $region5
  $region4: #{offset_scale.1} parent=0 // pred_region
    _
  $region5: #{offset_scale.1} parent=0 // pred_fallthru
    _
  // Predicated region
  $region6: #{offset_scale.1} parent=0 // pred_check
    _
  $region7: #{offset_scale.1} parent=0 // pred_check_branch
    %10 = sbr.rel (0) target = $region9
  $region8: #{offset_scale.1} parent=0 // pred_region
    _
  $region9: #{offset_scale.1} parent=0 // pred_fallthru
    _
  %v11 = vld [vmem:[%s0] sm:$0xf]
  %v12 = vld [vmem:[%s1] ss:$2 sm:$0xf]
  %s13 = scalar_lea.vmem %s1, 1
  %v14 = vld [vmem:[%s13] ss:$2 sm:$0xf]
  %v15 = vmul.f32 %v11, %v12
  %v16 = vadd.f32 %v15, %v14
  %v17 = vlaneseq
  %vm18 = vcmp.ge.s32.totalorder %v17, 0
  %vm19 = vcmp.lt.s32.totalorder %v17, 512
  %vm20 = vmand %vm18, %vm19
  %21 = vst.msk [vmem:[%s2] sm:$0xf] %vm20, %v16
  // Predicated region
  $region10: #{offset_scale.1} parent=0 // pred_check
    _
  $region11: #{offset_scale.1} parent=0 // pred_check_branch
    %23 = sbr.rel (0) target = $region13
  $region12: #{offset_scale.1} parent=0 // pred_region
    _
  $region13: #{offset_scale.1} parent=0 // pred_fallthru
    _
  // Predicated region
  $region14: #{offset_scale.1} parent=0 // pred_check
    _
  $region15: #{offset_scale.1} parent=0 // pred_check_branch
    %25 = sbr.rel (0) target = $region17
  $region16: #{offset_scale.1} parent=0 // pred_region
    _
  $region17: #{offset_scale.1} parent=0 // pred_fallthru
    _

</llo_original>
